<compile_context>
chip_gen: v6e
topology: v6e:2x2x1
jax: 0.10.0
libtpu: 0.0.40
codegen_flags: <defaults>
</compile_context>

<pallas_src>
import functools

import jax
import jax.numpy as jnp
import numpy as np
from jax.experimental import pallas as pl
from jax.experimental.pallas import tpu as pltpu


def _cdsnnl_kernel(pa_ref, pcols_ref, reps_ref, out_ref, sim_ref, *,
                   bs, n_points, delta, gamma, temperature):
    """Grid step i: chamfer sims of cloud i vs all clouds; SNNL on last step."""
    f32 = jnp.float32
    i = pl.program_id(0)
    last = pl.num_programs(0) - 1
    n = n_points

    @pl.when(i == 0)
    def _():
        sim_ref[...] = jnp.zeros_like(sim_ref)
        out_ref[...] = jnp.zeros_like(out_ref)

    # ---- chamfer sims for row i against all bs clouds ----------------------
    pa = pa_ref[...].astype(f32)                           # (n, 3) cloud i
    # Hoist the per-channel lane-broadcasts of cloud i out of the j loop.
    pax = jnp.broadcast_to(pa[:, 0:1], (n, n))
    pay = jnp.broadcast_to(pa[:, 1:2], (n, n))
    paz = jnp.broadcast_to(pa[:, 2:3], (n, n))

    lane = jax.lax.broadcasted_iota(jnp.int32, (1, bs), 1)
    inv_n = f32(1.0 / n_points)

    def body(j, row):
        pb = pcols_ref[j]                                  # (3, n) cloud j, lane-dense
        dx = pax - pb[0:1, :]
        d2 = dx * dx
        dy = pay - pb[1:2, :]
        d2 = d2 + dy * dy
        dz = paz - pb[2:3, :]
        d2 = d2 + dz * dz                                  # (n, n) squared dists
        min_b = jnp.min(d2, axis=1, keepdims=True)         # (n, 1) min over b
        min_a = jnp.min(d2, axis=0, keepdims=True)         # (1, n) min over a
        sim_ij = (jnp.sum(min_b) + jnp.sum(min_a)) * inv_n
        return jnp.where(lane == j, sim_ij, row)           # single-vreg select

    row = jax.lax.fori_loop(0, bs, body, jnp.zeros((1, bs), f32), unroll=True)

    # Dense write of row i into the resident (bs, bs) sim scratch (one store/i).
    ri = jax.lax.broadcasted_iota(jnp.int32, (bs, bs), 0)
    sim_ref[...] = jnp.where(ri == i, jnp.broadcast_to(row, (bs, bs)),
                             sim_ref[...])

    # ---- fused SNNL epilogue on the last grid step --------------------------
    @pl.when(i == last)
    def _():
        sim = sim_ref[...]                                 # (bs, bs)
        reps = reps_ref[...].astype(f32)                   # (bs, D)

        rr = jax.lax.broadcasted_iota(jnp.int32, (bs, bs), 0)
        cc = jax.lax.broadcasted_iota(jnp.int32, (bs, bs), 1)
        smap = jnp.logical_and(sim < f32(delta), rr != cc)
        sim_w = jnp.maximum(f32(1.0) - sim * f32(gamma), f32(0.0))

        # F.normalize(reps, dim=1) via rsqrt (EUP) instead of sqrt + divide.
        sq = jnp.sum(reps * reps, axis=1, keepdims=True)
        repsn = reps * jax.lax.rsqrt(jnp.maximum(sq, f32(1e-24)))
        # Contract dim 1 of both operands directly -> no explicit transpose.
        sims = jax.lax.dot_general(repsn, repsn, (((1,), (1,)), ((), ())),
                                   preferred_element_type=f32) / f32(temperature)
        exps = jnp.exp(sims)

        # Masked weighted mean; empty mask -> 0.0001 (torch mean([]) is NaN path).
        w = jnp.where(smap, exps * sim_w, f32(0.0))
        cnt = jnp.sum(smap.astype(f32))
        pexp = jnp.where(cnt > f32(0.0),
                         jnp.sum(w) / jnp.maximum(cnt, f32(1.0)),
                         f32(0.0001))
        pexp = jnp.maximum(pexp, f32(0.0001))
        texp = jnp.sum(exps)
        loss = -jnp.log(pexp / texp)
        out_ref[...] = jnp.broadcast_to(loss, (1, 1)).astype(out_ref.dtype)


def cdsnnl(reps, pc, delta=0.01, gamma=10.0, temperature=50.0):
    """Pallas-TPU CDSNNL forward. reps: (bs, D), pc: (bs, n_points, 3)."""
    bs, n_points, _ = pc.shape
    rep_dim = reps.shape[1]
    pc_rows = pc.astype(jnp.float32)                       # (bs, n, 3)
    # Lane-dense (bs, 3, n) copy; only bs*n*12 bytes, VMEM-resident in-kernel.
    pc_cols = jnp.transpose(pc_rows, (0, 2, 1))
    reps = reps.astype(jnp.float32)

    # Rough VMEM budget: d2 tile + 3 hoisted channel broadcasts + resident
    # inputs + scratch, with headroom; clamp to stay inside every chip's VMEM.
    est = 4 * (5 * n_points * n_points + 4 * bs * 3 * n_points
               + 2 * bs * rep_dim + 4 * bs * bs) + (2 << 20)
    vmem_limit = int(min(max(est, 8 << 20), 96 << 20))

    out = pl.pallas_call(
        functools.partial(_cdsnnl_kernel, bs=bs, n_points=n_points,
                          delta=float(delta), gamma=float(gamma),
                          temperature=float(temperature)),
        out_shape=jax.ShapeDtypeStruct((1, 1), jnp.float32),
        grid=(bs,),
        in_specs=[
            pl.BlockSpec((None, n_points, 3), lambda i: (i, 0, 0)),   # cloud i rows
            pl.BlockSpec((bs, 3, n_points), lambda i: (0, 0, 0)),     # resident
            pl.BlockSpec((bs, rep_dim), lambda i: (0, 0)),            # resident
        ],
        out_specs=pl.BlockSpec((1, 1), lambda i: (0, 0)),
        scratch_shapes=[pltpu.VMEM((bs, bs), jnp.float32)],
        compiler_params=pltpu.CompilerParams(
            dimension_semantics=("arbitrary",),
            vmem_limit_bytes=vmem_limit),
    )(pc_rows, pc_cols, reps)
    return out[0, 0]


def cdsnnl_ref(reps, pc, delta=0.01, gamma=10.0, temperature=50.0):
    """Pure-JAX reference mirroring the PyTorch forward semantics."""
    bs, n, _ = pc.shape
    d2 = jnp.sum((pc[:, None, :, None, :] - pc[None, :, None, :, :]) ** 2, -1)
    d_ab = jnp.mean(jnp.min(d2, axis=3), axis=2)     # mean_a min_b
    d_ba = jnp.mean(jnp.min(d2, axis=2), axis=2)     # mean_b min_a
    sim = d_ab + d_ba                                # sim[i, j] = cd(pc[j], pc[i])
    smap = (sim < delta) & (~jnp.eye(bs, dtype=bool))
    sim_w = jnp.maximum(1.0 - sim * gamma, 0.0)
    repsn = reps / jnp.maximum(
        jnp.sqrt(jnp.sum(reps * reps, axis=1, keepdims=True)), 1e-12)
    sims = (repsn @ repsn.T) / temperature
    exps = jnp.exp(sims)
    cnt = jnp.sum(smap.astype(jnp.float32))
    pexp = jnp.sum(jnp.where(smap, exps * sim_w, 0.0)) / cnt
    pexp = jnp.where(jnp.isnan(pexp), 1e-4, pexp)
    pexp = jnp.maximum(pexp, 1e-4)
    texp = jnp.sum(exps)
    return -jnp.log(pexp / texp)


def _make_inputs(key, bs, n_points, rep_dim):
    k1, k2, k3 = jax.random.split(key, 3)
    # Two tight clusters of point clouds so that the positive mask is non-empty.
    base_a = jax.random.uniform(k1, (n_points, 3), dtype=jnp.float32)
    base_b = base_a + 1.0
    bases = jnp.stack([base_a, base_a, base_b, base_b][:bs])        # (bs, n, 3)
    pc = bases + 0.01 * jax.random.normal(k2, (bs, n_points, 3), dtype=jnp.float32)
    reps = jax.random.normal(k3, (bs, rep_dim), dtype=jnp.float32)
    return reps, pc


if __name__ == "__main__":
    key = jax.random.PRNGKey(0)
    k_main, k_ragged = jax.random.split(key, 2)

    # Primary check: bs=4, n_points=16, rep_dim=32.
    reps, pc = _make_inputs(k_main, bs=4, n_points=16, rep_dim=32)
    out = jax.block_until_ready(cdsnnl(reps, pc))
    ref = cdsnnl_ref(reps, pc)
    np.testing.assert_allclose(np.asarray(out), np.asarray(ref),
                               rtol=5e-3, atol=5e-4)

    # Ragged-n check (n not a multiple of 8/128) to confirm padded lanes never
    # leak into the min reductions.
    reps2, pc2 = _make_inputs(k_ragged, bs=4, n_points=100, rep_dim=32)
    out2 = jax.block_until_ready(cdsnnl(reps2, pc2))
    ref2 = cdsnnl_ref(reps2, pc2)
    np.testing.assert_allclose(np.asarray(out2), np.asarray(ref2),
                               rtol=5e-3, atol=5e-4)

    print("KERNEL_OK")
</pallas_src>

<mosaic_0001>
module attributes {stable_mosaic.version = 11 : i64} {
  func.func @_cdsnnl_kernel(%arg0: i32, %arg1: memref<1x16x3xf32, #tpu.memory_space<vmem>>, %arg2: memref<4x3x16xf32, #tpu.memory_space<vmem>>, %arg3: memref<4x32xf32, #tpu.memory_space<vmem>>, %arg4: memref<1x1xf32, #tpu.memory_space<vmem>>, %arg5: memref<4x4xf32, #tpu.memory_space<vmem>>) attributes {dimension_semantics = [#tpu.dimension_semantics<arbitrary>], iteration_bounds = array<i64: 4>, scalar_prefetch = 0 : i64, scratch_operands = 1 : i64, tpu.core_type = #tpu.core_type<tc>, window_params = [{transform_indices = @transform_0, window_bounds = array<i64: 1, 16, 3>}, {pipeline_mode = #tpu.pipeline_mode<synchronous>, transform_indices = @transform_1, window_bounds = array<i64: 4, 3, 16>}, {pipeline_mode = #tpu.pipeline_mode<synchronous>, transform_indices = @transform_2, window_bounds = array<i64: 4, 32>}, {pipeline_mode = #tpu.pipeline_mode<synchronous>, transform_indices = @transform_3, window_bounds = array<i64: 1, 1>}]} {
    %c0_i32 = arith.constant 0 : i32
    %0 = arith.cmpi eq, %arg0, %c0_i32 : i32
    %1 = arith.extui %0 : i1 to i32
    %c0_i32_0 = arith.constant 0 : i32
    %2 = arith.cmpi ne, %1, %c0_i32_0 : i32
    scf.if %2 {
      %cst_35 = arith.constant 0.000000e+00 : f32
      %167 = vector.broadcast %cst_35 : f32 to vector<4x4xf32>
      %c0_36 = arith.constant 0 : index
      %c0_37 = arith.constant 0 : index
      %168 = vector.load %arg5[%c0_36, %c0_37] : memref<4x4xf32, #tpu.memory_space<vmem>>, vector<4x4xf32>
      tpu.vector_store %arg5[%c0_36, %c0_37], %167 {strides = array<i32>} : memref<4x4xf32, #tpu.memory_space<vmem>>, vector<4x4xf32>,
      %cst_38 = arith.constant 0.000000e+00 : f32
      %169 = vector.broadcast %cst_38 : f32 to vector<1x1xf32>
      %c0_39 = arith.constant 0 : index
      %c0_40 = arith.constant 0 : index
      %170 = vector.load %arg4[%c0_39, %c0_40] : memref<1x1xf32, #tpu.memory_space<vmem>>, vector<1x1xf32>
      tpu.vector_store %arg4[%c0_39, %c0_40], %169 {strides = array<i32>} : memref<1x1xf32, #tpu.memory_space<vmem>>, vector<1x1xf32>,
    } else {
    }
    %c0 = arith.constant 0 : index
    %c0_1 = arith.constant 0 : index
    %c0_2 = arith.constant 0 : index
    %3 = vector.load %arg1[%c0, %c0_1, %c0_2] : memref<1x16x3xf32, #tpu.memory_space<vmem>>, vector<1x16x3xf32>
    %4 = vector.shape_cast %3 : vector<1x16x3xf32> to vector<16x3xf32>
    %5 = vector.extract_strided_slice %4 {offsets = [0, 0], sizes = [16, 1], strides = [1, 1]} : vector<16x3xf32> to vector<16x1xf32>
    %6 = vector.shape_cast %5 : vector<16x1xf32> to vector<16x1xf32>
    %7 = vector.broadcast %6 : vector<16x1xf32> to vector<16x16xf32>
    %8 = vector.extract_strided_slice %4 {offsets = [0, 1], sizes = [16, 1], strides = [1, 1]} : vector<16x3xf32> to vector<16x1xf32>
    %9 = vector.shape_cast %8 : vector<16x1xf32> to vector<16x1xf32>
    %10 = vector.broadcast %9 : vector<16x1xf32> to vector<16x16xf32>
    %11 = vector.extract_strided_slice %4 {offsets = [0, 2], sizes = [16, 1], strides = [1, 1]} : vector<16x3xf32> to vector<16x1xf32>
    %12 = vector.shape_cast %11 : vector<16x1xf32> to vector<16x1xf32>
    %13 = vector.broadcast %12 : vector<16x1xf32> to vector<16x16xf32>
    %14 = tpu.iota {dimensions = array<i32: 1>} : vector<1x4xi32>
    %cst = arith.constant 0.000000e+00 : f32
    %15 = vector.broadcast %cst : f32 to vector<1x4xf32>
    %cst_3 = arith.constant 6.250000e-02 : f32
    %c0_i32_4 = arith.constant 0 : i32
    %16 = arith.index_cast %c0_i32_4 : i32 to index
    %c0_5 = arith.constant 0 : index
    %c0_6 = arith.constant 0 : index
    %17 = vector.load %arg2[%16, %c0_5, %c0_6] : memref<4x3x16xf32, #tpu.memory_space<vmem>>, vector<1x3x16xf32>
    %18 = vector.shape_cast %17 : vector<1x3x16xf32> to vector<3x16xf32>
    %19 = vector.extract_strided_slice %18 {offsets = [0, 0], sizes = [1, 16], strides = [1, 1]} : vector<3x16xf32> to vector<1x16xf32>
    %20 = vector.broadcast %19 : vector<1x16xf32> to vector<16x16xf32>
    %21 = arith.subf %7, %20 : vector<16x16xf32>
    %22 = arith.mulf %21, %21 : vector<16x16xf32>
    %23 = vector.extract_strided_slice %18 {offsets = [1, 0], sizes = [1, 16], strides = [1, 1]} : vector<3x16xf32> to vector<1x16xf32>
    %24 = vector.broadcast %23 : vector<1x16xf32> to vector<16x16xf32>
    %25 = arith.subf %10, %24 : vector<16x16xf32>
    %26 = arith.mulf %25, %25 : vector<16x16xf32>
    %27 = arith.addf %22, %26 : vector<16x16xf32>
    %28 = vector.extract_strided_slice %18 {offsets = [2, 0], sizes = [1, 16], strides = [1, 1]} : vector<3x16xf32> to vector<1x16xf32>
    %29 = vector.broadcast %28 : vector<1x16xf32> to vector<16x16xf32>
    %30 = arith.subf %13, %29 : vector<16x16xf32>
    %31 = arith.mulf %30, %30 : vector<16x16xf32>
    %32 = arith.addf %27, %31 : vector<16x16xf32>
    %cst_7 = arith.constant dense<0x7F800000> : vector<16xf32>
    %33 = vector.multi_reduction <minimumf>, %32, %cst_7 [1] : vector<16x16xf32> to vector<16xf32>
    %34 = vector.shape_cast %33 : vector<16xf32> to vector<16x1xf32>
    %cst_8 = arith.constant dense<0x7F800000> : vector<16xf32>
    %35 = vector.multi_reduction <minimumf>, %32, %cst_8 [0] : vector<16x16xf32> to vector<16xf32>
    %36 = vector.shape_cast %35 : vector<16xf32> to vector<1x16xf32>
    %37 = vector.shape_cast %34 : vector<16x1xf32> to vector<1x16x1xf32>
    %cst_9 = arith.constant dense<0.000000e+00> : vector<1xf32>
    %38 = vector.multi_reduction <add>, %37, %cst_9 [1, 2] : vector<1x16x1xf32> to vector<1xf32>
    %39 = vector.shape_cast %38 : vector<1xf32> to vector<1x1x1xf32>
    %40 = vector.extract %39[0, 0, 0] : f32 from vector<1x1x1xf32>
    %41 = vector.shape_cast %36 : vector<1x16xf32> to vector<1x1x16xf32>
    %cst_10 = arith.constant dense<0.000000e+00> : vector<1xf32>
    %42 = vector.multi_reduction <add>, %41, %cst_10 [1, 2] : vector<1x1x16xf32> to vector<1xf32>
    %43 = vector.shape_cast %42 : vector<1xf32> to vector<1x1x1xf32>
    %44 = vector.extract %43[0, 0, 0] : f32 from vector<1x1x1xf32>
    %45 = arith.addf %40, %44 : f32
    %46 = arith.mulf %45, %cst_3 : f32
    %47 = vector.broadcast %c0_i32_4 : i32 to vector<1x4xi32>
    %48 = arith.cmpi eq, %14, %47 : vector<1x4xi32>
    %49 = vector.broadcast %46 : f32 to vector<1x4xf32>
    %50 = arith.select %48, %49, %15 : vector<1x4xi1>, vector<1x4xf32>
    %c1_i32 = arith.constant 1 : i32
    %51 = arith.index_cast %c1_i32 : i32 to index
    %c0_11 = arith.constant 0 : index
    %c0_12 = arith.constant 0 : index
    %52 = vector.load %arg2[%51, %c0_11, %c0_12] : memref<4x3x16xf32, #tpu.memory_space<vmem>>, vector<1x3x16xf32>
    %53 = vector.shape_cast %52 : vector<1x3x16xf32> to vector<3x16xf32>
    %54 = vector.extract_strided_slice %53 {offsets = [0, 0], sizes = [1, 16], strides = [1, 1]} : vector<3x16xf32> to vector<1x16xf32>
    %55 = vector.broadcast %54 : vector<1x16xf32> to vector<16x16xf32>
    %56 = arith.subf %7, %55 : vector<16x16xf32>
    %57 = arith.mulf %56, %56 : vector<16x16xf32>
    %58 = vector.extract_strided_slice %53 {offsets = [1, 0], sizes = [1, 16], strides = [1, 1]} : vector<3x16xf32> to vector<1x16xf32>
    %59 = vector.broadcast %58 : vector<1x16xf32> to vector<16x16xf32>
    %60 = arith.subf %10, %59 : vector<16x16xf32>
    %61 = arith.mulf %60, %60 : vector<16x16xf32>
    %62 = arith.addf %57, %61 : vector<16x16xf32>
    %63 = vector.extract_strided_slice %53 {offsets = [2, 0], sizes = [1, 16], strides = [1, 1]} : vector<3x16xf32> to vector<1x16xf32>
    %64 = vector.broadcast %63 : vector<1x16xf32> to vector<16x16xf32>
    %65 = arith.subf %13, %64 : vector<16x16xf32>
    %66 = arith.mulf %65, %65 : vector<16x16xf32>
    %67 = arith.addf %62, %66 : vector<16x16xf32>
    %cst_13 = arith.constant dense<0x7F800000> : vector<16xf32>
    %68 = vector.multi_reduction <minimumf>, %67, %cst_13 [1] : vector<16x16xf32> to vector<16xf32>
    %69 = vector.shape_cast %68 : vector<16xf32> to vector<16x1xf32>
    %cst_14 = arith.constant dense<0x7F800000> : vector<16xf32>
    %70 = vector.multi_reduction <minimumf>, %67, %cst_14 [0] : vector<16x16xf32> to vector<16xf32>
    %71 = vector.shape_cast %70 : vector<16xf32> to vector<1x16xf32>
    %72 = vector.shape_cast %69 : vector<16x1xf32> to vector<1x16x1xf32>
    %cst_15 = arith.constant dense<0.000000e+00> : vector<1xf32>
    %73 = vector.multi_reduction <add>, %72, %cst_15 [1, 2] : vector<1x16x1xf32> to vector<1xf32>
    %74 = vector.shape_cast %73 : vector<1xf32> to vector<1x1x1xf32>
    %75 = vector.extract %74[0, 0, 0] : f32 from vector<1x1x1xf32>
    %76 = vector.shape_cast %71 : vector<1x16xf32> to vector<1x1x16xf32>
    %cst_16 = arith.constant dense<0.000000e+00> : vector<1xf32>
    %77 = vector.multi_reduction <add>, %76, %cst_16 [1, 2] : vector<1x1x16xf32> to vector<1xf32>
    %78 = vector.shape_cast %77 : vector<1xf32> to vector<1x1x1xf32>
    %79 = vector.extract %78[0, 0, 0] : f32 from vector<1x1x1xf32>
    %80 = arith.addf %75, %79 : f32
    %81 = arith.mulf %80, %cst_3 : f32
    %82 = vector.broadcast %c1_i32 : i32 to vector<1x4xi32>
    %83 = arith.cmpi eq, %14, %82 : vector<1x4xi32>
    %84 = vector.broadcast %81 : f32 to vector<1x4xf32>
    %85 = arith.select %83, %84, %50 : vector<1x4xi1>, vector<1x4xf32>
    %c2_i32 = arith.constant 2 : i32
    %86 = arith.index_cast %c2_i32 : i32 to index
    %c0_17 = arith.constant 0 : index
    %c0_18 = arith.constant 0 : index
    %87 = vector.load %arg2[%86, %c0_17, %c0_18] : memref<4x3x16xf32, #tpu.memory_space<vmem>>, vector<1x3x16xf32>
    %88 = vector.shape_cast %87 : vector<1x3x16xf32> to vector<3x16xf32>
    %89 = vector.extract_strided_slice %88 {offsets = [0, 0], sizes = [1, 16], strides = [1, 1]} : vector<3x16xf32> to vector<1x16xf32>
    %90 = vector.broadcast %89 : vector<1x16xf32> to vector<16x16xf32>
    %91 = arith.subf %7, %90 : vector<16x16xf32>
    %92 = arith.mulf %91, %91 : vector<16x16xf32>
    %93 = vector.extract_strided_slice %88 {offsets = [1, 0], sizes = [1, 16], strides = [1, 1]} : vector<3x16xf32> to vector<1x16xf32>
    %94 = vector.broadcast %93 : vector<1x16xf32> to vector<16x16xf32>
    %95 = arith.subf %10, %94 : vector<16x16xf32>
    %96 = arith.mulf %95, %95 : vector<16x16xf32>
    %97 = arith.addf %92, %96 : vector<16x16xf32>
    %98 = vector.extract_strided_slice %88 {offsets = [2, 0], sizes = [1, 16], strides = [1, 1]} : vector<3x16xf32> to vector<1x16xf32>
    %99 = vector.broadcast %98 : vector<1x16xf32> to vector<16x16xf32>
    %100 = arith.subf %13, %99 : vector<16x16xf32>
    %101 = arith.mulf %100, %100 : vector<16x16xf32>
    %102 = arith.addf %97, %101 : vector<16x16xf32>
    %cst_19 = arith.constant dense<0x7F800000> : vector<16xf32>
    %103 = vector.multi_reduction <minimumf>, %102, %cst_19 [1] : vector<16x16xf32> to vector<16xf32>
    %104 = vector.shape_cast %103 : vector<16xf32> to vector<16x1xf32>
    %cst_20 = arith.constant dense<0x7F800000> : vector<16xf32>
    %105 = vector.multi_reduction <minimumf>, %102, %cst_20 [0] : vector<16x16xf32> to vector<16xf32>
    %106 = vector.shape_cast %105 : vector<16xf32> to vector<1x16xf32>
    %107 = vector.shape_cast %104 : vector<16x1xf32> to vector<1x16x1xf32>
    %cst_21 = arith.constant dense<0.000000e+00> : vector<1xf32>
    %108 = vector.multi_reduction <add>, %107, %cst_21 [1, 2] : vector<1x16x1xf32> to vector<1xf32>
    %109 = vector.shape_cast %108 : vector<1xf32> to vector<1x1x1xf32>
    %110 = vector.extract %109[0, 0, 0] : f32 from vector<1x1x1xf32>
    %111 = vector.shape_cast %106 : vector<1x16xf32> to vector<1x1x16xf32>
    %cst_22 = arith.constant dense<0.000000e+00> : vector<1xf32>
    %112 = vector.multi_reduction <add>, %111, %cst_22 [1, 2] : vector<1x1x16xf32> to vector<1xf32>
    %113 = vector.shape_cast %112 : vector<1xf32> to vector<1x1x1xf32>
    %114 = vector.extract %113[0, 0, 0] : f32 from vector<1x1x1xf32>
    %115 = arith.addf %110, %114 : f32
    %116 = arith.mulf %115, %cst_3 : f32
    %117 = vector.broadcast %c2_i32 : i32 to vector<1x4xi32>
    %118 = arith.cmpi eq, %14, %117 : vector<1x4xi32>
    %119 = vector.broadcast %116 : f32 to vector<1x4xf32>
    %120 = arith.select %118, %119, %85 : vector<1x4xi1>, vector<1x4xf32>
    %c3_i32 = arith.constant 3 : i32
    %121 = arith.index_cast %c3_i32 : i32 to index
    %c0_23 = arith.constant 0 : index
    %c0_24 = arith.constant 0 : index
    %122 = vector.load %arg2[%121, %c0_23, %c0_24] : memref<4x3x16xf32, #tpu.memory_space<vmem>>, vector<1x3x16xf32>
    %123 = vector.shape_cast %122 : vector<1x3x16xf32> to vector<3x16xf32>
    %124 = vector.extract_strided_slice %123 {offsets = [0, 0], sizes = [1, 16], strides = [1, 1]} : vector<3x16xf32> to vector<1x16xf32>
    %125 = vector.broadcast %124 : vector<1x16xf32> to vector<16x16xf32>
    %126 = arith.subf %7, %125 : vector<16x16xf32>
    %127 = arith.mulf %126, %126 : vector<16x16xf32>
    %128 = vector.extract_strided_slice %123 {offsets = [1, 0], sizes = [1, 16], strides = [1, 1]} : vector<3x16xf32> to vector<1x16xf32>
    %129 = vector.broadcast %128 : vector<1x16xf32> to vector<16x16xf32>
    %130 = arith.subf %10, %129 : vector<16x16xf32>
    %131 = arith.mulf %130, %130 : vector<16x16xf32>
    %132 = arith.addf %127, %131 : vector<16x16xf32>
    %133 = vector.extract_strided_slice %123 {offsets = [2, 0], sizes = [1, 16], strides = [1, 1]} : vector<3x16xf32> to vector<1x16xf32>
    %134 = vector.broadcast %133 : vector<1x16xf32> to vector<16x16xf32>
    %135 = arith.subf %13, %134 : vector<16x16xf32>
    %136 = arith.mulf %135, %135 : vector<16x16xf32>
    %137 = arith.addf %132, %136 : vector<16x16xf32>
    %cst_25 = arith.constant dense<0x7F800000> : vector<16xf32>
    %138 = vector.multi_reduction <minimumf>, %137, %cst_25 [1] : vector<16x16xf32> to vector<16xf32>
    %139 = vector.shape_cast %138 : vector<16xf32> to vector<16x1xf32>
    %cst_26 = arith.constant dense<0x7F800000> : vector<16xf32>
    %140 = vector.multi_reduction <minimumf>, %137, %cst_26 [0] : vector<16x16xf32> to vector<16xf32>
    %141 = vector.shape_cast %140 : vector<16xf32> to vector<1x16xf32>
    %142 = vector.shape_cast %139 : vector<16x1xf32> to vector<1x16x1xf32>
    %cst_27 = arith.constant dense<0.000000e+00> : vector<1xf32>
    %143 = vector.multi_reduction <add>, %142, %cst_27 [1, 2] : vector<1x16x1xf32> to vector<1xf32>
    %144 = vector.shape_cast %143 : vector<1xf32> to vector<1x1x1xf32>
    %145 = vector.extract %144[0, 0, 0] : f32 from vector<1x1x1xf32>
    %146 = vector.shape_cast %141 : vector<1x16xf32> to vector<1x1x16xf32>
    %cst_28 = arith.constant dense<0.000000e+00> : vector<1xf32>
    %147 = vector.multi_reduction <add>, %146, %cst_28 [1, 2] : vector<1x1x16xf32> to vector<1xf32>
    %148 = vector.shape_cast %147 : vector<1xf32> to vector<1x1x1xf32>
    %149 = vector.extract %148[0, 0, 0] : f32 from vector<1x1x1xf32>
    %150 = arith.addf %145, %149 : f32
    %151 = arith.mulf %150, %cst_3 : f32
    %152 = vector.broadcast %c3_i32 : i32 to vector<1x4xi32>
    %153 = arith.cmpi eq, %14, %152 : vector<1x4xi32>
    %154 = vector.broadcast %151 : f32 to vector<1x4xf32>
    %155 = arith.select %153, %154, %120 : vector<1x4xi1>, vector<1x4xf32>
    %c4_i32 = arith.constant 4 : i32
    %156 = tpu.iota {dimensions = array<i32: 0>} : vector<4x4xi32>
    %157 = vector.broadcast %arg0 : i32 to vector<4x4xi32>
    %158 = arith.cmpi eq, %156, %157 : vector<4x4xi32>
    %159 = vector.shape_cast %155 : vector<1x4xf32> to vector<1x4xf32>
    %160 = vector.broadcast %159 : vector<1x4xf32> to vector<4x4xf32>
    %c0_29 = arith.constant 0 : index
    %c0_30 = arith.constant 0 : index
    %161 = vector.load %arg5[%c0_29, %c0_30] : memref<4x4xf32, #tpu.memory_space<vmem>>, vector<4x4xf32>
    %162 = arith.select %158, %160, %161 : vector<4x4xi1>, vector<4x4xf32>
    %c0_31 = arith.constant 0 : index
    %c0_32 = arith.constant 0 : index
    %163 = vector.load %arg5[%c0_31, %c0_32] : memref<4x4xf32, #tpu.memory_space<vmem>>, vector<4x4xf32>
    tpu.vector_store %arg5[%c0_31, %c0_32], %162 {strides = array<i32>} : memref<4x4xf32, #tpu.memory_space<vmem>>, vector<4x4xf32>,
    %c3_i32_33 = arith.constant 3 : i32
    %164 = arith.cmpi eq, %arg0, %c3_i32_33 : i32
    %165 = arith.extui %164 : i1 to i32
    %c0_i32_34 = arith.constant 0 : i32
    %166 = arith.cmpi ne, %165, %c0_i32_34 : i32
    scf.if %166 {
      %c0_35 = arith.constant 0 : index
      %c0_36 = arith.constant 0 : index
      %167 = vector.load %arg5[%c0_35, %c0_36] : memref<4x4xf32, #tpu.memory_space<vmem>>, vector<4x4xf32>
      %c0_37 = arith.constant 0 : index
      %c0_38 = arith.constant 0 : index
      %168 = vector.load %arg3[%c0_37, %c0_38] : memref<4x32xf32, #tpu.memory_space<vmem>>, vector<4x32xf32>
      %169 = tpu.iota {dimensions = array<i32: 0>} : vector<4x4xi32>
      %170 = tpu.iota {dimensions = array<i32: 1>} : vector<4x4xi32>
      %cst_39 = arith.constant 0.00999999977 : f32
      %171 = vector.broadcast %cst_39 : f32 to vector<4x4xf32>
      %172 = arith.cmpf olt, %167, %171 : vector<4x4xf32>
      %173 = arith.cmpi ne, %169, %170 : vector<4x4xi32>
      %174 = arith.andi %172, %173 : vector<4x4xi1>
      %cst_40 = arith.constant 1.000000e+01 : f32
      %175 = vector.broadcast %cst_40 : f32 to vector<4x4xf32>
      %176 = arith.mulf %167, %175 : vector<4x4xf32>
      %cst_41 = arith.constant 1.000000e+00 : f32
      %177 = vector.broadcast %cst_41 : f32 to vector<4x4xf32>
      %178 = arith.subf %177, %176 : vector<4x4xf32>
      %cst_42 = arith.constant 0.000000e+00 : f32
      %179 = vector.broadcast %cst_42 : f32 to vector<4x4xf32>
      %180 = arith.maximumf %178, %179 : vector<4x4xf32>
      %181 = arith.mulf %168, %168 : vector<4x32xf32>
      %cst_43 = arith.constant dense<0.000000e+00> : vector<4xf32>
      %182 = vector.multi_reduction <add>, %181, %cst_43 [1] : vector<4x32xf32> to vector<4xf32>
      %183 = vector.shape_cast %182 : vector<4xf32> to vector<4x1xf32>
      %cst_44 = arith.constant 1.000000e-24 : f32
      %184 = vector.broadcast %cst_44 : f32 to vector<4x1xf32>
      %185 = arith.maximumf %183, %184 : vector<4x1xf32>
      %186 = math.rsqrt %185 : vector<4x1xf32>
      %187 = vector.broadcast %186 : vector<4x1xf32> to vector<4x32xf32>
      %188 = arith.mulf %168, %187 : vector<4x32xf32>
      %cst_45 = arith.constant dense<0.000000e+00> : vector<4x4xf32>
      %189 = tpu.matmul %188, %188, %cst_45 {dimension_numbers = #tpu.dot_dimension_numbers<[1], [1], [0], [0], [0, 0, 1, 0], [], []>} : vector<4x32xf32>, vector<4x32xf32>, vector<4x4xf32> -> vector<4x4xf32>
      %cst_46 = arith.constant 5.000000e+01 : f32
      %190 = vector.broadcast %cst_46 : f32 to vector<4x4xf32>
      %191 = arith.divf %189, %190 : vector<4x4xf32>
      %192 = math.exp %191 : vector<4x4xf32>
      %193 = arith.mulf %192, %180 : vector<4x4xf32>
      %cst_47 = arith.constant 0.000000e+00 : f32
      %194 = vector.broadcast %cst_47 : f32 to vector<4x4xf32>
      %195 = arith.select %174, %193, %194 : vector<4x4xi1>, vector<4x4xf32>
      %196 = arith.extui %174 : vector<4x4xi1> to vector<4x4xi32>
      %197 = arith.sitofp %196 : vector<4x4xi32> to vector<4x4xf32>
      %198 = vector.shape_cast %197 : vector<4x4xf32> to vector<1x4x4xf32>
      %cst_48 = arith.constant dense<0.000000e+00> : vector<1xf32>
      %199 = vector.multi_reduction <add>, %198, %cst_48 [1, 2] : vector<1x4x4xf32> to vector<1xf32>
      %200 = vector.shape_cast %199 : vector<1xf32> to vector<1x1x1xf32>
      %201 = vector.extract %200[0, 0, 0] : f32 from vector<1x1x1xf32>
      %cst_49 = arith.constant 0.000000e+00 : f32
      %202 = arith.cmpf ogt, %201, %cst_49 : f32
      %203 = vector.shape_cast %195 : vector<4x4xf32> to vector<1x4x4xf32>
      %cst_50 = arith.constant dense<0.000000e+00> : vector<1xf32>
      %204 = vector.multi_reduction <add>, %203, %cst_50 [1, 2] : vector<1x4x4xf32> to vector<1xf32>
      %205 = vector.shape_cast %204 : vector<1xf32> to vector<1x1x1xf32>
      %206 = vector.extract %205[0, 0, 0] : f32 from vector<1x1x1xf32>
      %cst_51 = arith.constant 1.000000e+00 : f32
      %207 = arith.maximumf %201, %cst_51 : f32
      %208 = arith.divf %206, %207 : f32
      %cst_52 = arith.constant 9.99999974E-5 : f32
      %209 = arith.select %202, %208, %cst_52 : f32
      %cst_53 = arith.constant 9.99999974E-5 : f32
      %210 = arith.maximumf %209, %cst_53 : f32
      %211 = vector.shape_cast %192 : vector<4x4xf32> to vector<1x4x4xf32>
      %cst_54 = arith.constant dense<0.000000e+00> : vector<1xf32>
      %212 = vector.multi_reduction <add>, %211, %cst_54 [1, 2] : vector<1x4x4xf32> to vector<1xf32>
      %213 = vector.shape_cast %212 : vector<1xf32> to vector<1x1x1xf32>
      %214 = vector.extract %213[0, 0, 0] : f32 from vector<1x1x1xf32>
      %215 = arith.divf %210, %214 : f32
      %216 = math.log %215 : f32
      %cst_55 = arith.constant 0.000000e+00 : f32
      %217 = arith.subf %cst_55, %216 : f32
      %218 = vector.broadcast %217 : f32 to vector<1x1xf32>
      %c0_56 = arith.constant 0 : index
      %c0_57 = arith.constant 0 : index
      %219 = vector.load %arg4[%c0_56, %c0_57] : memref<1x1xf32, #tpu.memory_space<vmem>>, vector<1x1xf32>
      tpu.vector_store %arg4[%c0_56, %c0_57], %218 {strides = array<i32>} : memref<1x1xf32, #tpu.memory_space<vmem>>, vector<1x1xf32>,
    } else {
    }
    return
  }
  func.func @transform_0(%arg0: i32) -> (i32, i32, i32) {
    %c0_i32 = arith.constant 0 : i32
    %c0_i32_0 = arith.constant 0 : i32
    %c0_i32_1 = arith.constant 0 : i32
    return %arg0, %c0_i32, %c0_i32_0 : i32, i32, i32
  }
  func.func @transform_1(%arg0: i32) -> (i32, i32, i32) {
    %c0_i32 = arith.constant 0 : i32
    %c0_i32_0 = arith.constant 0 : i32
    %c0_i32_1 = arith.constant 0 : i32
    %c0_i32_2 = arith.constant 0 : i32
    return %c0_i32, %c0_i32_0, %c0_i32_1 : i32, i32, i32
  }
  func.func @transform_2(%arg0: i32) -> (i32, i32) {
    %c0_i32 = arith.constant 0 : i32
    %c0_i32_0 = arith.constant 0 : i32
    %c0_i32_1 = arith.constant 0 : i32
    return %c0_i32, %c0_i32_0 : i32, i32
  }
  func.func @transform_3(%arg0: i32) -> (i32, i32) {
    %c0_i32 = arith.constant 0 : i32
    %c0_i32_0 = arith.constant 0 : i32
    %c0_i32_1 = arith.constant 0 : i32
    return %c0_i32, %c0_i32_0 : i32, i32
  }
}

</mosaic_0001>

<llo_original>
// kernel: tpu_custom_call.1
$region0: #{tpu_custom_call.1}
  #allocation0 [shape = 'u32[]', space=smem, size = 0x4, offset = 0x4, fixed_abs, tag = 'smem constant byte address 0x4 - core index']
  #allocation1 [shape = 'u32[144,128]{1,0:T(1,128)}', space=vmem, size = 0x12000, scoped, tag = 'internal scratch']
  #allocation2 [shape = 'f32[4,4]{1,0:T(4,128)}', space=vmem, size = 0x800, scoped, tag = 'scratch operand']
  %s0 = inlined_call_operand.vmem [shape: f32[4,16,3], index: 0, kind: input, shape index: {}]
  %s1 = inlined_call_operand.vmem [shape: f32[4,3,16], index: 1, kind: input, shape index: {}]
  %s2 = inlined_call_operand.vmem [shape: f32[4,32], index: 2, kind: input, shape index: {}]
  %s3 = inlined_call_operand.hbm [shape: f32[1,1], index: 3, kind: output, shape index: {}]
  %s4 = sld [smem:[#allocation0]]
  $region53: #{tpu_custom_call.1} parent=0
    _
  %s6 = ssub.s32 1, %s4
  %s7 = scalar_select 0, %s6, %s4
  $region1: #{tpu_custom_call.1} parent=0
    #allocation3 [shape = 'u8[512]{0}', space=vmem, size = 0x400, scoped, tag = 'output window, operand 0, single buffered']
    #allocation4 [shape = 's32[2]{0}', space=sflag, size = 0x8, scoped, tag = 'scoped memory for tpu_custom_call.1']
    %8 = vsyncpa [#allocation4], 0
    loop: start=0, step=1, limit=6
    $region2: #{tpu_custom_call.1} parent=1 // loop_pre_header
      _
    $region3: #{tpu_custom_call.1} parent=1 // loop_header
      %s10 = sphi 0, %s14
      %p11 = scmp.ge.s32.totalorder %s10, 6
      %s20 = sphi 0, %s22
      %s23 = sphi 0, %s20
      %s24 = sphi 0, %s23
      %s40 = sphi 0, %s24
      %s44 = sphi 0, %s44
      %s46 = sphi 0, %s44
      %s47 = sphi 0, %s46
      %s61 = sphi 0, %s47
      %s65 = sphi 0, %s65
      %s67 = sphi 0, %s65
      %s68 = sphi 0, %s67
      %s82 = sphi 0, %s68
      %s86 = sphi 0, %s86
      %s88 = sphi 0, %s86
      %s89 = sphi 0, %s88
      %s103 = sphi 0, %s89
    $region4: #{tpu_custom_call.1} parent=1 // loop_header_branch
      %13 = sbr.rel (%p11) target = $region8
    $region5: #{tpu_custom_call.1} parent=1 // loop_body
      %s15 = ssub.s32 %s10, 1
      %s16 = ssub.s32 %s10, 2
      %s17 = sadd.s32 %s10, 1
      %s18 = ssub.s32 %s10, %s17
      %p19 = scmp.eq.s32.totalorder %s18, 0
      %s21 = sadd.s32 %s20, 1
      %s22 = scalar_select %p19, %s20, %s21
      %p25 = pneg %p19
      %p26 = scmp.eq.s32.totalorder %s10, 3
      %p27 = por %p25, %p26
      %p28 = scmp.ne.s32.totalorder %s20, %s23
      %p29 = scmp.eq.s32.totalorder %s10, 0
      %p30 = por %p28, %p29
      %p31 = scmp.ne.s32.totalorder %s20, %s23
      %p32 = scmp.eq.s32.totalorder %s15, 3
      %p33 = por %p31, %p32
      %p34 = scmp.ne.s32.totalorder %s23, %s24
      %p35 = scmp.eq.s32.totalorder %s15, 0
      %p36 = por %p34, %p35
      %p37 = scmp.ne.s32.totalorder %s23, %s24
      %p38 = scmp.eq.s32.totalorder %s16, 3
      %p39 = por %p37, %p38
      %p41 = scmp.ne.s32.totalorder %s24, %s40
      %p42 = scmp.eq.s32.totalorder %s16, 0
      %p43 = por %p41, %p42
      %s45 = sadd.s32 %s44, 1
      %p48 = scmp.eq.s32.totalorder %s10, 3
      %p49 = scmp.ne.s32.totalorder %s44, %s46
      %p50 = scmp.eq.s32.totalorder %s10, 0
      %p51 = por %p49, %p50
      %p52 = scmp.ne.s32.totalorder %s44, %s46
      %p53 = scmp.eq.s32.totalorder %s15, 3
      %p54 = por %p52, %p53
      %p55 = scmp.ne.s32.totalorder %s46, %s47
      %p56 = scmp.eq.s32.totalorder %s15, 0
      %p57 = por %p55, %p56
      %p58 = scmp.ne.s32.totalorder %s46, %s47
      %p59 = scmp.eq.s32.totalorder %s16, 3
      %p60 = por %p58, %p59
      %p62 = scmp.ne.s32.totalorder %s47, %s61
      %p63 = scmp.eq.s32.totalorder %s16, 0
      %p64 = por %p62, %p63
      %s66 = sadd.s32 %s65, 1
      %p69 = scmp.eq.s32.totalorder %s10, 3
      %p70 = scmp.ne.s32.totalorder %s65, %s67
      %p71 = scmp.eq.s32.totalorder %s10, 0
      %p72 = por %p70, %p71
      %p73 = scmp.ne.s32.totalorder %s65, %s67
      %p74 = scmp.eq.s32.totalorder %s15, 3
      %p75 = por %p73, %p74
      %p76 = scmp.ne.s32.totalorder %s67, %s68
      %p77 = scmp.eq.s32.totalorder %s15, 0
      %p78 = por %p76, %p77
      %p79 = scmp.ne.s32.totalorder %s67, %s68
      %p80 = scmp.eq.s32.totalorder %s16, 3
      %p81 = por %p79, %p80
      %p83 = scmp.ne.s32.totalorder %s68, %s82
      %p84 = scmp.eq.s32.totalorder %s16, 0
      %p85 = por %p83, %p84
      %s87 = sadd.s32 %s86, 1
      %p90 = scmp.eq.s32.totalorder %s10, 3
      %p91 = scmp.ne.s32.totalorder %s86, %s88
      %p92 = scmp.eq.s32.totalorder %s10, 0
      %p93 = por %p91, %p92
      %p94 = scmp.ne.s32.totalorder %s86, %s88
      %p95 = scmp.eq.s32.totalorder %s15, 3
      %p96 = por %p94, %p95
      %p97 = scmp.ne.s32.totalorder %s88, %s89
      %p98 = scmp.eq.s32.totalorder %s15, 0
      %p99 = por %p97, %p98
      %p100 = scmp.ne.s32.totalorder %s88, %s89
      %p101 = scmp.eq.s32.totalorder %s16, 3
      %p102 = por %p100, %p101
      %p104 = scmp.ne.s32.totalorder %s89, %s103
      %p105 = scmp.eq.s32.totalorder %s16, 0
      %p106 = por %p104, %p105
      %p107 = scmp.le.s32.totalorder 1, %s10
      %p108 = scmp.lt.s32.totalorder %s10, 5
      %p109 = pnand %p107, %p108
      %p110 = pneg %p109
      // Predicated region
      $region9: #{tpu_custom_call.1} parent=5 // pred_check
        _
      $region10: #{tpu_custom_call.1} parent=5 // pred_check_branch
        %112 = sbr.rel (%p109) target = $region12
      $region11: #{tpu_custom_call.1} parent=5 // pred_region
        %s113 = ssub.s32 %s10, 1
        // Predicated region
        $region13: #{tpu_custom_call.1} parent=11 // pred_check
          %p114 = pneg %p57
        $region14: #{tpu_custom_call.1} parent=11 // pred_check_branch
          %116 = sbr.rel (%p114) target = $region16
        $region15: #{tpu_custom_call.1} parent=11 // pred_region
          _
        $region16: #{tpu_custom_call.1} parent=11 // pred_fallthru
          _
        // Predicated region
        $region17: #{tpu_custom_call.1} parent=11 // pred_check
          %p117 = pneg %p78
        $region18: #{tpu_custom_call.1} parent=11 // pred_check_branch
          %119 = sbr.rel (%p117) target = $region20
        $region19: #{tpu_custom_call.1} parent=11 // pred_region
          _
        $region20: #{tpu_custom_call.1} parent=11 // pred_fallthru
          _
      $region12: #{tpu_custom_call.1} parent=5 // pred_fallthru
        _
      %p120 = scmp.lt.s32.totalorder %s10, 4
      // Predicated region
      $region21: #{tpu_custom_call.1} parent=5 // pred_check
        %p121 = pneg %p120
      $region22: #{tpu_custom_call.1} parent=5 // pred_check_branch
        %123 = sbr.rel (%p121) target = $region24
      $region23: #{tpu_custom_call.1} parent=5 // pred_region
        // Predicated region
        $region25: #{tpu_custom_call.1} parent=23 // pred_check
          %p124 = pneg %p30
        $region26: #{tpu_custom_call.1} parent=23 // pred_check_branch
          %126 = sbr.rel (%p124) target = $region28
        $region27: #{tpu_custom_call.1} parent=23 // pred_region
          %p127 = scmp.lt.s32.totalorder %s10, 3
          %s128 = scalar_select %p127, %s10, 3
          %s129 = smul.addr %s128, 2
          %s130 = smul.addr %s129, 8
          %s131 = scalar_lea.vmem %s0, %s130
        $region28: #{tpu_custom_call.1} parent=23 // pred_fallthru
          _
      $region24: #{tpu_custom_call.1} parent=5 // pred_fallthru
        _
      %p132 = scmp.le.s32.totalorder 1, %s10
      %p133 = scmp.lt.s32.totalorder %s10, 5
      %p134 = pnand %p132, %p133
      %p135 = pneg %p134
      // Predicated region
      $region29: #{tpu_custom_call.1} parent=5 // pred_check
        _
      $region30: #{tpu_custom_call.1} parent=5 // pred_check_branch
        %137 = sbr.rel (%p134) target = $region32
      $region31: #{tpu_custom_call.1} parent=5 // pred_region
        %s138 = ssub.s32 %s10, 1
        %p139 = scmp.lt.s32.totalorder %s15, 3
        %s140 = scalar_select %p139, %s15, 3
        %s141 = smul.addr %s140, 2
        %s142 = smul.addr %s141, 8
        %s143 = scalar_lea.vmem %s0, %s142
        %p144 = pneg %p36
        %p145 = pneg %p33
        %p146 = pneg %p57
        %p147 = pneg %p54
        %p148 = pneg %p78
        %p149 = pneg %p75
        %p150 = pneg %p99
        %p151 = pneg %p96
        %p152 = scmp.lt.s32.totalorder %s15, 3
        %s153 = scalar_select %p152, %s15, 3
        %s154 = smul.addr %s153, 2
        %s155 = smul.addr %s154, 8
        %s156 = scalar_lea.vmem %s0, %s155
        %p157 = scmp.eq.s32.totalorder %s15, 0
        // Predicated region
        $region33: #{tpu_custom_call.1} parent=31 // pred_check
          %p158 = pneg %p157
        $region34: #{tpu_custom_call.1} parent=31 // pred_check_branch
          %160 = sbr.rel (%p158) target = $region36
        $region35: #{tpu_custom_call.1} parent=31 // pred_region
          %vm161 = vcmask 27648
          %162 = vst.msk [vmem:[#allocation2] sm:$0xf] %vm161, 0.0
          %vm163 = vcmask 0
          %164 = vst.msk [vmem:[#allocation3] sm:$0x1] %vm163, 0.0
        $region36: #{tpu_custom_call.1} parent=31 // pred_fallthru
          _
        %v165 = vld [vmem:[%s156] sm:$0xff]
        %v166 = vld [vmem:[%s156 + $0x8] sm:$0xff]
        %168 = vset.pattern.permute.xlu0 0
        %169 = vperm.xlu0 %168, %v165
        %v170 = vpop.permute.xlu0 %169
        %173 = vset.pattern.permute.xlu0 0
        %174 = vperm.xlu0 %173, %v166
        %v175 = vpop.permute.xlu0 %174
        %177 = vset.pattern.permute.xlu0 1
        %178 = vperm.xlu0 %177, %v165
        %v179 = vpop.permute.xlu0 %178
        %181 = vset.pattern.permute.xlu0 1
        %182 = vperm.xlu0 %181, %v166
        %v183 = vpop.permute.xlu0 %182
        %185 = vset.pattern.permute.xlu0 2
        %186 = vperm.xlu0 %185, %v165
        %v187 = vpop.permute.xlu0 %186
        %189 = vset.pattern.permute.xlu0 2
        %190 = vperm.xlu0 %189, %v166
        %v191 = vpop.permute.xlu0 %190
        %v193 = vlaneseq
        %v194 = vand.u32 %v193, 127
        %v195 = vld [vmem:[%s1] sm:$0x7]
        %v196 = vlaneseq
        %v197 = vshrl.u32 %v196, 7
        %v198 = vsub.s32 0, %v197
        %v199 = vrot.slane %v195, %v198
        %v200 = vsub.f32 %v170, %v199
        %v201 = vsub.f32 %v175, %v199
        %v202 = vmul.f32 %v200, %v200
        %v203 = vmul.f32 %v201, %v201
        %v204 = vlaneseq
        %v205 = vshrl.u32 %v204, 7
        %v206 = vsub.s32 1, %v205
        %v207 = vrot.slane %v195, %v206
        %v208 = vsub.f32 %v179, %v207
        %v209 = vsub.f32 %v183, %v207
        %v210 = vmul.f32 %v208, %v208
        %v211 = vmul.f32 %v209, %v209
        %v212 = vadd.f32 %v202, %v210
        %v213 = vadd.f32 %v203, %v211
        %v214 = vlaneseq
        %v215 = vshrl.u32 %v214, 7
        %v216 = vsub.s32 2, %v215
        %v217 = vrot.slane %v195, %v216
        %v218 = vsub.f32 %v187, %v217
        %v219 = vsub.f32 %v191, %v217
        %v220 = vmul.f32 %v218, %v218
        %v221 = vmul.f32 %v219, %v219
        %v222 = vadd.f32 %v212, %v220
        %v223 = vadd.f32 %v213, %v221
        %vm224 = vcmask 130048
        %v225 = vsel %vm224, %v222, inf
        %226 = vmin.xlane.f32.xlu0 %v225
        %v227 = vpop.xlane.xlu0 %226
        %v228 = vsel %vm224, %v223, inf
        %229 = vmin.xlane.f32.xlu0 %v228
        %v230 = vpop.xlane.xlu0 %229
        %v231 = vmin.f32 %v225, %v228
        %v232 = vrot.slane %v231, 4
        %v233 = vmin.f32 %v231, %v232
        %v234 = vrot.slane %v233, 2
        %v235 = vmin.f32 %v233, %v234
        %v236 = vrot.slane %v235, 1
        %v237 = vmin.f32 %v235, %v236
        %vm238 = vcmask 7168
        %v239 = vsel %vm238, %v227, 0.0
        %v240 = vsel %vm238, %v230, 0.0
        %v241 = vadd.f32 %v239, %v240
        %242 = vadd.xlane.f32.xlu0 %v241
        %v243 = vpop.xlane.xlu0 %242
        %v244 = vrot.slane %v243, 4
        %v245 = vadd.f32 %v243, %v244
        %v246 = vrot.slane %v245, 2
        %v247 = vadd.f32 %v245, %v246
        %v248 = vrot.slane %v247, 1
        %v249 = vadd.f32 %v247, %v248
        %s250 = vtos %v249
        %vm251 = vcmask 122880
        %v252 = vsel %vm251, %v237, 0.0
        %253 = vadd.xlane.f32.xlu0 %v252
        %v254 = vpop.xlane.xlu0 %253
        %v255 = vrot.slane %v254, 4
        %v256 = vadd.f32 %v254, %v255
        %v257 = vrot.slane %v256, 2
        %v258 = vadd.f32 %v256, %v257
        %v259 = vrot.slane %v258, 1
        %v260 = vadd.f32 %v258, %v259
        %s261 = vtos %v260
        %s262 = sadd.f32 %s250, %s261
        %s263 = smul.f32 %s262, 0.0625
        %vm264 = vcmp.eq.s32.totalorder %v194, 0
        %v265 = vstv %s263
        %v266 = vsel %vm264, %v265, 0.0
        %s267 = scalar_lea.vmem %s1, 4
        %v268 = vld [vmem:[%s267] sm:$0x7]
        %v269 = vlaneseq
        %v270 = vshrl.u32 %v269, 7
        %v271 = vsub.s32 0, %v270
        %v272 = vrot.slane %v268, %v271
        %v273 = vsub.f32 %v170, %v272
        %v274 = vsub.f32 %v175, %v272
        %v275 = vmul.f32 %v273, %v273
        %v276 = vmul.f32 %v274, %v274
        %v277 = vlaneseq
        %v278 = vshrl.u32 %v277, 7
        %v279 = vsub.s32 1, %v278
        %v280 = vrot.slane %v268, %v279
        %v281 = vsub.f32 %v179, %v280
        %v282 = vsub.f32 %v183, %v280
        %v283 = vmul.f32 %v281, %v281
        %v284 = vmul.f32 %v282, %v282
        %v285 = vadd.f32 %v275, %v283
        %v286 = vadd.f32 %v276, %v284
        %v287 = vlaneseq
        %v288 = vshrl.u32 %v287, 7
        %v289 = vsub.s32 2, %v288
        %v290 = vrot.slane %v268, %v289
        %v291 = vsub.f32 %v187, %v290
        %v292 = vsub.f32 %v191, %v290
        %v293 = vmul.f32 %v291, %v291
        %v294 = vmul.f32 %v292, %v292
        %v295 = vadd.f32 %v285, %v293
        %v296 = vadd.f32 %v286, %v294
        %v297 = vsel %vm224, %v295, inf
        %298 = vmin.xlane.f32.xlu0 %v297
        %v299 = vpop.xlane.xlu0 %298
        %v300 = vsel %vm224, %v296, inf
        %301 = vmin.xlane.f32.xlu0 %v300
        %v302 = vpop.xlane.xlu0 %301
        %v303 = vmin.f32 %v297, %v300
        %v304 = vrot.slane %v303, 4
        %v305 = vmin.f32 %v303, %v304
        %v306 = vrot.slane %v305, 2
        %v307 = vmin.f32 %v305, %v306
        %v308 = vrot.slane %v307, 1
        %v309 = vmin.f32 %v307, %v308
        %v310 = vsel %vm238, %v299, 0.0
        %v311 = vsel %vm238, %v302, 0.0
        %v312 = vadd.f32 %v310, %v311
        %313 = vadd.xlane.f32.xlu0 %v312
        %v314 = vpop.xlane.xlu0 %313
        %v315 = vrot.slane %v314, 4
        %v316 = vadd.f32 %v314, %v315
        %v317 = vrot.slane %v316, 2
        %v318 = vadd.f32 %v316, %v317
        %v319 = vrot.slane %v318, 1
        %v320 = vadd.f32 %v318, %v319
        %s321 = vtos %v320
        %v322 = vsel %vm251, %v309, 0.0
        %323 = vadd.xlane.f32.xlu0 %v322
        %v324 = vpop.xlane.xlu0 %323
        %v325 = vrot.slane %v324, 4
        %v326 = vadd.f32 %v324, %v325
        %v327 = vrot.slane %v326, 2
        %v328 = vadd.f32 %v326, %v327
        %v329 = vrot.slane %v328, 1
        %v330 = vadd.f32 %v328, %v329
        %s331 = vtos %v330
        %s332 = sadd.f32 %s321, %s331
        %s333 = smul.f32 %s332, 0.0625
        %vm334 = vcmp.eq.s32.totalorder %v194, 1
        %v335 = vstv %s333
        %v336 = vsel %vm334, %v335, %v266
        %s337 = scalar_lea.vmem %s1, 8
        %v338 = vld [vmem:[%s337] sm:$0x7]
        %v339 = vlaneseq
        %v340 = vshrl.u32 %v339, 7
        %v341 = vsub.s32 0, %v340
        %v342 = vrot.slane %v338, %v341
        %v343 = vsub.f32 %v170, %v342
        %v344 = vsub.f32 %v175, %v342
        %v345 = vmul.f32 %v343, %v343
        %v346 = vmul.f32 %v344, %v344
        %v347 = vlaneseq
        %v348 = vshrl.u32 %v347, 7
        %v349 = vsub.s32 1, %v348
        %v350 = vrot.slane %v338, %v349
        %v351 = vsub.f32 %v179, %v350
        %v352 = vsub.f32 %v183, %v350
        %v353 = vmul.f32 %v351, %v351
        %v354 = vmul.f32 %v352, %v352
        %v355 = vadd.f32 %v345, %v353
        %v356 = vadd.f32 %v346, %v354
        %v357 = vlaneseq
        %v358 = vshrl.u32 %v357, 7
        %v359 = vsub.s32 2, %v358
        %v360 = vrot.slane %v338, %v359
        %v361 = vsub.f32 %v187, %v360
        %v362 = vsub.f32 %v191, %v360
        %v363 = vmul.f32 %v361, %v361
        %v364 = vmul.f32 %v362, %v362
        %v365 = vadd.f32 %v355, %v363
        %v366 = vadd.f32 %v356, %v364
        %v367 = vsel %vm224, %v365, inf
        %368 = vmin.xlane.f32.xlu0 %v367
        %v369 = vpop.xlane.xlu0 %368
        %v370 = vsel %vm224, %v366, inf
        %371 = vmin.xlane.f32.xlu0 %v370
        %v372 = vpop.xlane.xlu0 %371
        %v373 = vmin.f32 %v367, %v370
        %v374 = vrot.slane %v373, 4
        %v375 = vmin.f32 %v373, %v374
        %v376 = vrot.slane %v375, 2
        %v377 = vmin.f32 %v375, %v376
        %v378 = vrot.slane %v377, 1
        %v379 = vmin.f32 %v377, %v378
        %v380 = vsel %vm238, %v369, 0.0
        %v381 = vsel %vm238, %v372, 0.0
        %v382 = vadd.f32 %v380, %v381
        %383 = vadd.xlane.f32.xlu0 %v382
        %v384 = vpop.xlane.xlu0 %383
        %v385 = vrot.slane %v384, 4
        %v386 = vadd.f32 %v384, %v385
        %v387 = vrot.slane %v386, 2
        %v388 = vadd.f32 %v386, %v387
        %v389 = vrot.slane %v388, 1
        %v390 = vadd.f32 %v388, %v389
        %s391 = vtos %v390
        %v392 = vsel %vm251, %v379, 0.0
        %393 = vadd.xlane.f32.xlu0 %v392
        %v394 = vpop.xlane.xlu0 %393
        %v395 = vrot.slane %v394, 4
        %v396 = vadd.f32 %v394, %v395
        %v397 = vrot.slane %v396, 2
        %v398 = vadd.f32 %v396, %v397
        %v399 = vrot.slane %v398, 1
        %v400 = vadd.f32 %v398, %v399
        %s401 = vtos %v400
        %s402 = sadd.f32 %s391, %s401
        %s403 = smul.f32 %s402, 0.0625
        %vm404 = vcmp.eq.s32.totalorder %v194, 2
        %v405 = vstv %s403
        %v406 = vsel %vm404, %v405, %v336
        %s407 = scalar_lea.vmem %s1, 12
        %v408 = vld [vmem:[%s407] sm:$0x7]
        %v409 = vlaneseq
        %v410 = vshrl.u32 %v409, 7
        %v411 = vsub.s32 0, %v410
        %v412 = vrot.slane %v408, %v411
        %v413 = vsub.f32 %v170, %v412
        %v414 = vsub.f32 %v175, %v412
        %v415 = vmul.f32 %v413, %v413
        %v416 = vmul.f32 %v414, %v414
        %v417 = vlaneseq
        %v418 = vshrl.u32 %v417, 7
        %v419 = vsub.s32 1, %v418
        %v420 = vrot.slane %v408, %v419
        %v421 = vsub.f32 %v179, %v420
        %v422 = vsub.f32 %v183, %v420
        %v423 = vmul.f32 %v421, %v421
        %v424 = vmul.f32 %v422, %v422
        %v425 = vadd.f32 %v415, %v423
        %v426 = vadd.f32 %v416, %v424
        %v427 = vlaneseq
        %v428 = vshrl.u32 %v427, 7
        %v429 = vsub.s32 2, %v428
        %v430 = vrot.slane %v408, %v429
        %v431 = vsub.f32 %v187, %v430
        %v432 = vsub.f32 %v191, %v430
        %v433 = vmul.f32 %v431, %v431
        %v434 = vmul.f32 %v432, %v432
        %v435 = vadd.f32 %v425, %v433
        %v436 = vadd.f32 %v426, %v434
        %v437 = vsel %vm224, %v435, inf
        %438 = vmin.xlane.f32.xlu0 %v437
        %v439 = vpop.xlane.xlu0 %438
        %v440 = vsel %vm224, %v436, inf
        %441 = vmin.xlane.f32.xlu0 %v440
        %v442 = vpop.xlane.xlu0 %441
        %v443 = vmin.f32 %v437, %v440
        %v444 = vrot.slane %v443, 4
        %v445 = vmin.f32 %v443, %v444
        %v446 = vrot.slane %v445, 2
        %v447 = vmin.f32 %v445, %v446
        %v448 = vrot.slane %v447, 1
        %v449 = vmin.f32 %v447, %v448
        %v450 = vsel %vm238, %v439, 0.0
        %v451 = vsel %vm238, %v442, 0.0
        %v452 = vadd.f32 %v450, %v451
        %453 = vadd.xlane.f32.xlu0 %v452
        %v454 = vpop.xlane.xlu0 %453
        %v455 = vrot.slane %v454, 4
        %v456 = vadd.f32 %v454, %v455
        %v457 = vrot.slane %v456, 2
        %v458 = vadd.f32 %v456, %v457
        %v459 = vrot.slane %v458, 1
        %v460 = vadd.f32 %v458, %v459
        %s461 = vtos %v460
        %v462 = vsel %vm251, %v449, 0.0
        %463 = vadd.xlane.f32.xlu0 %v462
        %v464 = vpop.xlane.xlu0 %463
        %v465 = vrot.slane %v464, 4
        %v466 = vadd.f32 %v464, %v465
        %v467 = vrot.slane %v466, 2
        %v468 = vadd.f32 %v466, %v467
        %v469 = vrot.slane %v468, 1
        %v470 = vadd.f32 %v468, %v469
        %s471 = vtos %v470
        %s472 = sadd.f32 %s461, %s471
        %s473 = smul.f32 %s472, 0.0625
        %vm474 = vcmp.eq.s32.totalorder %v194, 3
        %v475 = vstv %s473
        %v476 = vsel %vm474, %v475, %v406
        %v477 = vlaneseq
        %v478 = vshrl.u32 %v477, 7
        %v479 = vstv %s15
        %vm480 = vcmp.eq.s32.totalorder %v478, %v479
        %v481 = vld [vmem:[#allocation2] sm:$0xf]
        %v482 = vsel %vm480, %v476, %v481
        %vm483 = vcmask 27648
        %484 = vst.msk [vmem:[#allocation2] sm:$0xf] %vm483, %v482
        %p485 = scmp.eq.s32.totalorder %s15, 3
        // Predicated region
        $region37: #{tpu_custom_call.1} parent=31 // pred_check
          %p486 = pneg %p485
        $region38: #{tpu_custom_call.1} parent=31 // pred_check_branch
          %488 = sbr.rel (%p486) target = $region40
        $region39: #{tpu_custom_call.1} parent=31 // pred_region
          %v489 = vld [vmem:[#allocation2] sm:$0xf]
          %v490 = vld [vmem:[%s2] sm:$0xf]
          %vm491 = vcmp.lt.f32.partialorder %v489, 0.01
          %vm492 = vcmp.ne.s32.totalorder %v478, %v194
          %vm493 = vmand %vm491, %vm492
          %v494 = vmul.f32 %v489, 10.0
          %v495 = vsub.f32 1.0, %v494
          %v496 = vmax.f32 %v495, 0.0
          %v497 = vmul.f32 %v490, %v490
          %vm498 = vcmask 257024
          %v499 = vsel %vm498, %v497, 0.0
          %500 = vadd.xlane.f32.xlu0 %v499
          %v501 = vpop.xlane.xlu0 %500
          %v502 = vmax.f32 %v501, 1e-24
          %v503 = vrsqrt.pop %v502
          %v504 = vmul.f32 %v490, %v503
          %vm505 = vcmask 261120
          %v507 = vsel %vm505, %v504, 0
          %509 = vmatprep.subr.mxu0 0.0
          %510 = vmatpush1.xpose.msra.mxu0 0.0
          %511 = vmatprep.subr.mxu0 0.0
          %512 = vmatpush1.xpose.msra.mxu0 0.0
          %513 = vmatprep.subr.mxu0 0.0
          %514 = vmatpush1.xpose.msra.mxu0 0.0
          %515 = vmatprep.subr.mxu0 0.0
          %516 = vmatpush1.xpose.msra.mxu0 0.0
          %517 = vmatprep.subr.mxu0 0.0
          %518 = vmatpush1.xpose.msra.mxu0 0.0
          %519 = vmatprep.subr.mxu0 0.0
          %520 = vmatpush1.xpose.msra.mxu0 0.0
          %521 = vmatprep.subr.mxu0 0.0
          %522 = vmatpush1.xpose.msra.mxu0 0.0
          %523 = vmatprep.subr.mxu0 0.0
          %524 = vmatpush1.xpose.msra.mxu0 0.0
          %525 = vmatprep.subr.mxu0 0.0
          %526 = vmatpush1.xpose.msra.mxu0 0.0
          %527 = vmatprep.subr.mxu0 0.0
          %528 = vmatpush1.xpose.msra.mxu0 0.0
          %529 = vmatprep.subr.mxu0 0.0
          %530 = vmatpush1.xpose.msra.mxu0 0.0
          %531 = vmatprep.subr.mxu0 0.0
          %532 = vmatpush1.xpose.msra.mxu0 0.0
          %533 = vmatprep.subr.mxu0 0.0
          %534 = vmatpush1.xpose.msra.mxu0 0.0
          %535 = vmatprep.subr.mxu0 0.0
          %536 = vmatpush1.xpose.msra.mxu0 0.0
          %537 = vmatprep.subr.mxu0 0.0
          %538 = vmatpush1.xpose.msra.mxu0 0.0
          %539 = vmatprep.subr.mxu0 0.0
          %540 = vmatpush1.xpose.msra.mxu0 %v507
          %541 = vmatprep.subr.mxu0 0.0
          %542 = vmatpush2.xpose.msra.mxu0 0.0
          %543 = vmatprep.subr.mxu0 0.0
          %544 = vmatpush2.xpose.msra.mxu0 0.0
          %545 = vmatprep.subr.mxu0 0.0
          %546 = vmatpush2.xpose.msra.mxu0 0.0
          %547 = vmatprep.subr.mxu0 0.0
          %548 = vmatpush2.xpose.msra.mxu0 0.0
          %549 = vmatprep.subr.mxu0 0.0
          %550 = vmatpush2.xpose.msra.mxu0 0.0
          %551 = vmatprep.subr.mxu0 0.0
          %552 = vmatpush2.xpose.msra.mxu0 0.0
          %553 = vmatprep.subr.mxu0 0.0
          %554 = vmatpush2.xpose.msra.mxu0 0.0
          %555 = vmatprep.subr.mxu0 0.0
          %556 = vmatpush2.xpose.msra.mxu0 0.0
          %557 = vmatprep.subr.mxu0 0.0
          %558 = vmatpush2.xpose.msra.mxu0 0.0
          %559 = vmatprep.subr.mxu0 0.0
          %560 = vmatpush2.xpose.msra.mxu0 0.0
          %561 = vmatprep.subr.mxu0 0.0
          %562 = vmatpush2.xpose.msra.mxu0 0.0
          %563 = vmatprep.subr.mxu0 0.0
          %564 = vmatpush2.xpose.msra.mxu0 0.0
          %565 = vmatprep.subr.mxu0 0.0
          %566 = vmatpush2.xpose.msra.mxu0 0.0
          %567 = vmatprep.subr.mxu0 0.0
          %568 = vmatpush2.xpose.msra.mxu0 0.0
          %569 = vmatprep.subr.mxu0 0.0
          %570 = vmatpush2.xpose.msra.mxu0 0.0
          %571 = vmatprep.subr.mxu0 0.0
          %572 = vmatpush2.xpose.msra.mxu0 0.0
          %573 = vmatprep.mubr.f32.mxu0 0.0
          %574 = vmatmul.mubr.f32.gmra.mxu0 %v507
          %v575 = vpop.f32.mrf.mxu0
          %v576 = vadd.f32 0.0, %v575
          %v577 = vpop.f32.mrf.mxu0
          %578 = vdwg.mxu0
          %v579 = vrcp.pop 50.0
          %v580 = vmul.f32 %v576, %v579
          %v581 = vmul.f32 %v580, 1.442695
          %v582 = vpow.pop %v581
          %v583 = vmul.f32 %v582, %v496
          %v584 = vsel %vm493, %v583, 0.0
          %v585 = vsel %vm493, 1, 0
          %v586 = vcvt.s32.f32 %v585
          %v587 = vsel %vm483, %v586, 0.0
          %588 = vadd.xlane.f32.xlu0 %v587
          %v589 = vpop.xlane.xlu0 %588
          %v590 = vrot.slane %v589, 4
          %v591 = vadd.f32 %v589, %v590
          %v592 = vrot.slane %v591, 2
          %v593 = vadd.f32 %v591, %v592
          %v594 = vrot.slane %v593, 1
          %v595 = vadd.f32 %v593, %v594
          %s596 = vtos %v595
          %p597 = scmp.gt.f32.partialorder %s596, 0.0
          %v598 = vsel %vm483, %v584, 0.0
          %599 = vadd.xlane.f32.xlu0 %v598
          %v600 = vpop.xlane.xlu0 %599
          %v601 = vrot.slane %v600, 4
          %v602 = vadd.f32 %v600, %v601
          %v603 = vrot.slane %v602, 2
          %v604 = vadd.f32 %v602, %v603
          %v605 = vrot.slane %v604, 1
          %v606 = vadd.f32 %v604, %v605
          %s607 = vtos %v606
          %s608 = smax.f32 %s596, 1.0
          %v609 = vstv %s608
          %v610 = vrcp.pop %v609
          %s611 = vtos %v610
          %s612 = smul.f32 %s607, %s611
          %s613 = scalar_select %p597, %s612, 0.0001
          %s614 = smax.f32 %s613, 0.0001
          %v615 = vsel %vm483, %v582, 0.0
          %616 = vadd.xlane.f32.xlu0 %v615
          %v617 = vpop.xlane.xlu0 %616
          %v618 = vrot.slane %v617, 4
          %v619 = vadd.f32 %v617, %v618
          %v620 = vrot.slane %v619, 2
          %v621 = vadd.f32 %v619, %v620
          %v622 = vrot.slane %v621, 1
          %v623 = vadd.f32 %v621, %v622
          %s624 = vtos %v623
          %v625 = vstv %s624
          %v626 = vrcp.pop %v625
          %s627 = vtos %v626
          %s628 = smul.f32 %s614, %s627
          %v629 = vstv %s628
          %v630 = vlog2.pop %v629
          %v631 = vmul.f32 %v630, 0.6931472
          %s632 = vtos %v631
          %s633 = ssub.f32 0.0, %s632
          %v634 = vstv %s633
          %vm635 = vcmask 0
          %636 = vst.msk [vmem:[#allocation3] sm:$0x1] %vm635, %v634
        $region40: #{tpu_custom_call.1} parent=31 // pred_fallthru
          _
        // Predicated region
        $region41: #{tpu_custom_call.1} parent=31 // pred_check
          %p637 = pneg %p96
        $region42: #{tpu_custom_call.1} parent=31 // pred_check_branch
          %639 = sbr.rel (%p637) target = $region44
        $region43: #{tpu_custom_call.1} parent=31 // pred_region
          %s641 = ssub.s32 16, 16
          %642 = vsyncadd [#allocation4], %s641
          %s644 = sshll.u32 [#allocation3], 4
          %s645 = int_to_ptr.vmem [resolvable:$true] %s644
          %647 = dma.vmem_to_hbm [thread:$0]  %s645, 16, %s3, [#allocation4]
        $region44: #{tpu_custom_call.1} parent=31 // pred_fallthru
          _
        // Predicated region
        $region45: #{tpu_custom_call.1} parent=31 // pred_check
          %p648 = pneg %p96
        $region46: #{tpu_custom_call.1} parent=31 // pred_check_branch
          %650 = sbr.rel (%p648) target = $region48
        $region47: #{tpu_custom_call.1} parent=31 // pred_region
          %651 = dma.done [#allocation4], 16
        $region48: #{tpu_custom_call.1} parent=31 // pred_fallthru
          _
      $region32: #{tpu_custom_call.1} parent=5 // pred_fallthru
        _
      %p652 = scmp.le.s32.totalorder 2, %s10
      // Predicated region
      $region49: #{tpu_custom_call.1} parent=5 // pred_check
        %p653 = pneg %p652
      $region50: #{tpu_custom_call.1} parent=5 // pred_check_branch
        %655 = sbr.rel (%p653) target = $region52
      $region51: #{tpu_custom_call.1} parent=5 // pred_region
        %s656 = ssub.s32 %s10, 2
      $region52: #{tpu_custom_call.1} parent=5 // pred_fallthru
        _
    $region6: #{tpu_custom_call.1} parent=1 // loop_footer
      %s14 = sadd.s32 1, %s10
    $region7: #{tpu_custom_call.1} parent=1 // loop_footer_branch
      %9 = sbr.rel target = $region3
    $region8: #{tpu_custom_call.1} parent=1 // loop_exit
      _
    %657 = vsyncpa [#allocation4], 1
    %s658 = scalar_lea.sflag [#allocation4], 1
    %659 = vsyncpa %s658, 1

</llo_original>
